<compile_context>
chip_gen: v7x
topology: tpu7x:2x2x1
jax: 0.10.0
libtpu: 0.0.40
codegen_flags: <defaults>
</compile_context>

<pallas_src>
import jax
import jax.numpy as jnp
from jax.experimental import pallas as pl
from jax.experimental.pallas import tpu as pltpu

# ----------------------------- config ---------------------------------------
VOCAB_SIZE = 100
EMBED_DIM = 32
SEQ_LEN = 16
NUM_FILTERS = 32
KERNEL_SIZES = (3, 4, 5)
NUM_CLASSES = 8
BATCH = 2

LANE = 128          # lane-pad target (vocab rows, fused filters, classes)
TAP_PAD = 8         # conv taps padded 5 -> 8 => im2col contraction 8*32 = 256


# ----------------------------- kernel ---------------------------------------
def wordcnn_kernel(tok_ref,     # (TB*S, 1)         int32
                   tab_ref,     # (LANE, D)         bf16  (vocab zero-padded)
                   cw_ref,      # (TAP_PAD*D, LANE) bf16  (tap+lane padded, flat)
                   mb_ref,      # (S, LANE)         f32   (conv bias + validity mask)
                   fcw_ref,     # (LANE, LANE)      f32   (zero-padded)
                   fcb_ref,     # (1, LANE)         f32
                   out_ref):    # (TB, LANE)        f32
    m = tok_ref.shape[0]                      # flattened batch*time rows
    v_pad, d = tab_ref.shape
    taps = cw_ref.shape[0] // d
    s, f_pad = mb_ref.shape
    tb = out_ref.shape[0]

    # 1) Embedding gather on the MXU: one_hot(tokens) @ table.
    #    Only viable because vocab <= 128 (table resident in VMEM, O(m*V) MXU
    #    work); for a larger vocab switch to scalar-prefetch row gather.
    #    One-hot row selection is exact, so the single bf16 downcast is exact.
    tok = tok_ref[...]                                              # (m, 1)
    onehot = (jax.lax.broadcasted_iota(jnp.int32, (m, v_pad), 1)
              == tok).astype(jnp.bfloat16)                          # (m, 128)
    emb = jnp.dot(onehot, tab_ref[...],
                  preferred_element_type=jnp.float32
                  ).astype(jnp.bfloat16)                            # (m, D) bf16

    # 2) im2col once, then ONE fused conv matmul (contraction = taps*D = 256).
    #    Tail rows are zero; cross-sample tap reads only ever meet zero tap
    #    weights (shorter branches / padded taps) or masked time positions.
    embp = jnp.concatenate(
        [emb, jnp.zeros((taps - 1, d), jnp.bfloat16)], axis=0)      # (m+7, D)
    cols = jnp.concatenate([embp[j:j + m, :] for j in range(taps)],
                           axis=1)                                  # (m, taps*D)
    acc = jnp.dot(cols, cw_ref[...],
                  preferred_element_type=jnp.float32)               # (m, 128) f32

    # 3) Fused conv-bias + time-validity mask, ReLU, max-over-time.
    #    Mask-before-ReLU is correct only together with ReLU clamping to 0.
    acc = acc.reshape(tb, s, f_pad) + mb_ref[...][None, :, :]       # (TB,S,128)
    pooled = jnp.max(jnp.maximum(acc, 0.0), axis=1)                 # (TB,128) f32

    # 4) concat + Linear fused into one zero-padded dot.  Kept f32 (tiny TB);
    #    switch operands to bf16 if TB grows and tolerance still holds.
    out_ref[...] = (jnp.dot(pooled, fcw_ref[...],
                            preferred_element_type=jnp.float32)
                    + fcb_ref[...]).astype(out_ref.dtype)

    # TODO(synk): dropout omitted (inference / eval mode => identity).


# ----------------------------- wrapper ---------------------------------------
def _pick_batch_block(batch, seq):
    # Target ~1024 flattened rows per grid step: fills MXU sublanes, stays far
    # below every generation's VMEM cap (v7x's 32 MiB scoped default is the
    # tightest; footprint is ~1.3 KiB/row), and yields >= 2 "parallel" grid
    # steps for non-trivial batches so v7x's second TensorCore engages.
    tb = max(1, 1024 // seq)
    if tb >= batch:
        return batch                       # whole batch in one step
    return max(8, (tb // 8) * 8)           # sublane-aligned output blocks


@jax.jit
def wordcnn_forward(tokens, params):
    B, S = tokens.shape
    D, F, C = EMBED_DIM, NUM_FILTERS, NUM_CLASSES
    K_MAX = max(KERNEL_SIZES)
    assert S >= K_MAX, "sequence shorter than the largest conv kernel"
    assert VOCAB_SIZE < LANE, "one-hot MXU gather requires vocab < 128"
    assert TAP_PAD >= K_MAX

    TB = _pick_batch_block(B, S)
    n_blk = pl.cdiv(B, TB)
    B_pad = n_blk * TB

    # ---- pack / fuse parameters (tiny; all zero-padding is exact) ----------
    # Tokens: pad the batch to a block multiple with id VOCAB_SIZE (a zero
    # table row), then flatten to the lane-1 column the kernel one-hots.
    tok = jnp.full((B_pad, S), VOCAB_SIZE, jnp.int32)
    tok = tok.at[:B].set(tokens.astype(jnp.int32)).reshape(B_pad * S, 1)

    # Vocab table padded to 128 rows (rows >= VOCAB_SIZE are zero).
    table = jnp.zeros((LANE, D), jnp.bfloat16).at[:VOCAB_SIZE, :].set(
        params["embedding"].astype(jnp.bfloat16))

    # Fused conv weights: 3 branches side by side (lane-padded 96 -> 128),
    # taps padded 5 -> 8, flattened to the im2col weight matrix (8*D, 128).
    conv_w = jnp.zeros((TAP_PAD, D, LANE), jnp.bfloat16)
    conv_b = jnp.zeros((LANE,), jnp.float32)
    valid = jnp.zeros((LANE,), jnp.int32)
    for i, k in enumerate(KERNEL_SIZES):
        conv_w = conv_w.at[:k, :, i * F:(i + 1) * F].set(
            params[f"w{k}"].astype(jnp.bfloat16))
        conv_b = conv_b.at[i * F:(i + 1) * F].set(
            params[f"b{k}"].reshape(-1).astype(jnp.float32))
        valid = valid.at[i * F:(i + 1) * F].set(S - k + 1)
    conv_w2d = conv_w.reshape(TAP_PAD * D, LANE)

    # Conv bias fused into the additive time-validity mask (S, 128):
    # bias where the time position is valid for that filter's branch, -1e30
    # otherwise (padded filter lanes have valid=0 => always masked).
    mask_bias = jnp.where(jnp.arange(S)[:, None] < valid[None, :],
                          conv_b[None, :], -1e30).astype(jnp.float32)

    # Fused FC: concat(feat3,feat4,feat5) @ W + b == pooled(128) @ Wpad + bpad.
    fc_w = jnp.zeros((LANE, LANE), jnp.float32).at[:3 * F, :C].set(
        params["fc_w"].astype(jnp.float32))
    fc_b = jnp.zeros((1, LANE), jnp.float32).at[:, :C].set(
        params["fc_b"].reshape(1, -1).astype(jnp.float32))

    full = lambda a: pl.BlockSpec(a.shape, lambda i: (0,) * a.ndim)

    out = pl.pallas_call(
        wordcnn_kernel,
        out_shape=jax.ShapeDtypeStruct((B_pad, LANE), jnp.float32),
        grid_spec=pltpu.PrefetchScalarGridSpec(
            num_scalar_prefetch=0,
            grid=(n_blk,),
            in_specs=[pl.BlockSpec((TB * S, 1), lambda i: (i, 0)),
                      full(table), full(conv_w2d), full(mask_bias),
                      full(fc_w), full(fc_b)],
            out_specs=pl.BlockSpec((TB, LANE), lambda i: (i, 0)),
        ),
        compiler_params=pltpu.CompilerParams(
            dimension_semantics=("parallel",)),
    )(tok, table, conv_w2d, mask_bias, fc_w, fc_b)

    return out[:B, :C]                                             # (B, C)


# --------------------------- reference (pure JAX) ----------------------------
def wordcnn_reference(tokens, params):
    emb = jnp.take(params["embedding"].astype(jnp.float32), tokens, axis=0)
    B, S, _ = emb.shape
    feats = []
    for k in KERNEL_SIZES:
        w = params[f"w{k}"].astype(jnp.float32)                   # (k, D, F)
        bias = params[f"b{k}"].astype(jnp.float32)
        L = S - k + 1
        acc = jnp.zeros((B, L, NUM_FILTERS), jnp.float32)
        for j in range(k):
            acc += jnp.einsum("bld,df->blf", emb[:, j:j + L, :], w[j])
        acc = jnp.maximum(acc + bias, 0.0)
        feats.append(jnp.max(acc, axis=1))                        # (B, F)
    feat = jnp.concatenate(feats, axis=-1)                        # (B, 3F)
    return feat @ params["fc_w"].astype(jnp.float32) \
        + params["fc_b"].astype(jnp.float32)


# ----------------------------- params ----------------------------------------
def init_params(key):
    ks = jax.random.split(key, 9)
    f32, bf16 = jnp.float32, jnp.bfloat16
    return {
        # matmul operands stored in bf16 (native MXU input dtype); biases/FC f32
        "embedding": (jax.random.normal(ks[0], (VOCAB_SIZE, EMBED_DIM), f32)
                      * 0.1).astype(bf16),
        "w3": (jax.random.normal(ks[1], (3, EMBED_DIM, NUM_FILTERS), f32)
               * 0.05).astype(bf16),
        "b3": jax.random.normal(ks[2], (1, NUM_FILTERS), f32) * 0.01,
        "w4": (jax.random.normal(ks[3], (4, EMBED_DIM, NUM_FILTERS), f32)
               * 0.05).astype(bf16),
        "b4": jax.random.normal(ks[4], (1, NUM_FILTERS), f32) * 0.01,
        "w5": (jax.random.normal(ks[5], (5, EMBED_DIM, NUM_FILTERS), f32)
               * 0.05).astype(bf16),
        "b5": jax.random.normal(ks[6], (1, NUM_FILTERS), f32) * 0.01,
        "fc_w": jax.random.normal(ks[7], (3 * NUM_FILTERS, NUM_CLASSES),
                                  f32) * 0.05,
        "fc_b": jax.random.normal(ks[8], (1, NUM_CLASSES), f32) * 0.01,
    }


# ----------------------------- main ------------------------------------------
if __name__ == "__main__":
    key = jax.random.PRNGKey(0)
    k_tok, k_par = jax.random.split(key)
    tokens = jax.random.randint(k_tok, (BATCH, SEQ_LEN), 0, VOCAB_SIZE,
                                dtype=jnp.int32)
    params = init_params(k_par)

    logits = jax.block_until_ready(wordcnn_forward(tokens, params))
    ref = wordcnn_reference(tokens, params)

    assert logits.shape == (BATCH, NUM_CLASSES)
    assert jnp.allclose(logits, ref, atol=1e-4, rtol=1e-4), \
        "mismatch vs reference"
    print("KERNEL_OK")
</pallas_src>

<mosaic_0001>
module attributes {stable_mosaic.version = 11 : i64} {
  func.func @wordcnn_kernel(%arg0: i32, %arg1: memref<32x1xi32, #tpu.memory_space<vmem>>, %arg2: memref<128x32xbf16, #tpu.memory_space<vmem>>, %arg3: memref<256x128xbf16, #tpu.memory_space<vmem>>, %arg4: memref<16x128xf32, #tpu.memory_space<vmem>>, %arg5: memref<128x128xf32, #tpu.memory_space<vmem>>, %arg6: memref<1x128xf32, #tpu.memory_space<vmem>>, %arg7: memref<2x128xf32, #tpu.memory_space<vmem>>) attributes {dimension_semantics = [#tpu.dimension_semantics<parallel>], iteration_bounds = array<i64: 1>, scalar_prefetch = 0 : i64, scratch_operands = 0 : i64, tpu.core_type = #tpu.core_type<tc>, window_params = [{transform_indices = @transform_0, window_bounds = array<i64: 32, 1>}, {pipeline_mode = #tpu.pipeline_mode<synchronous>, transform_indices = @transform_1, window_bounds = array<i64: 128, 32>}, {pipeline_mode = #tpu.pipeline_mode<synchronous>, transform_indices = @transform_2, window_bounds = array<i64: 256, 128>}, {pipeline_mode = #tpu.pipeline_mode<synchronous>, transform_indices = @transform_3, window_bounds = array<i64: 16, 128>}, {pipeline_mode = #tpu.pipeline_mode<synchronous>, transform_indices = @transform_4, window_bounds = array<i64: 128, 128>}, {pipeline_mode = #tpu.pipeline_mode<synchronous>, transform_indices = @transform_5, window_bounds = array<i64: 1, 128>}, {transform_indices = @transform_6, window_bounds = array<i64: 2, 128>}]} {
    %c0 = arith.constant 0 : index
    %c0_0 = arith.constant 0 : index
    %0 = vector.load %arg1[%c0, %c0_0] : memref<32x1xi32, #tpu.memory_space<vmem>>, vector<32x1xi32>
    %1 = tpu.iota {dimensions = array<i32: 1>} : vector<32x128xi32>
    %2 = vector.broadcast %0 : vector<32x1xi32> to vector<32x128xi32>
    %3 = arith.cmpi eq, %1, %2 : vector<32x128xi32>
    %4 = arith.extui %3 : vector<32x128xi1> to vector<32x128xi32>
    %5 = arith.sitofp %4 : vector<32x128xi32> to vector<32x128xf32>
    %6 = arith.truncf %5 : vector<32x128xf32> to vector<32x128xbf16>
    %c0_1 = arith.constant 0 : index
    %c0_2 = arith.constant 0 : index
    %7 = vector.load %arg2[%c0_1, %c0_2] : memref<128x32xbf16, #tpu.memory_space<vmem>>, vector<128x32xbf16>
    %cst = arith.constant dense<0.000000e+00> : vector<32x32xf32>
    %8 = tpu.matmul %6, %7, %cst {dimension_numbers = #tpu.dot_dimension_numbers<[1], [0], [0], [1], [0, 0, 1, 1], [], []>} : vector<32x128xbf16>, vector<128x32xbf16>, vector<32x32xf32> -> vector<32x32xf32>
    %9 = arith.truncf %8 : vector<32x32xf32> to vector<32x32xbf16>
    %cst_3 = arith.constant 0.000000e+00 : bf16
    %10 = vector.broadcast %cst_3 : bf16 to vector<7x32xbf16>
    %11 = tpu.concatenate %9, %10 in 0 : vector<32x32xbf16>, vector<7x32xbf16> -> vector<39x32xbf16>
    %12 = vector.extract_strided_slice %11 {offsets = [0, 0], sizes = [32, 32], strides = [1, 1]} : vector<39x32xbf16> to vector<32x32xbf16>
    %13 = vector.extract_strided_slice %11 {offsets = [1, 0], sizes = [32, 32], strides = [1, 1]} : vector<39x32xbf16> to vector<32x32xbf16>
    %14 = vector.extract_strided_slice %11 {offsets = [2, 0], sizes = [32, 32], strides = [1, 1]} : vector<39x32xbf16> to vector<32x32xbf16>
    %15 = vector.extract_strided_slice %11 {offsets = [3, 0], sizes = [32, 32], strides = [1, 1]} : vector<39x32xbf16> to vector<32x32xbf16>
    %16 = vector.extract_strided_slice %11 {offsets = [4, 0], sizes = [32, 32], strides = [1, 1]} : vector<39x32xbf16> to vector<32x32xbf16>
    %17 = vector.extract_strided_slice %11 {offsets = [5, 0], sizes = [32, 32], strides = [1, 1]} : vector<39x32xbf16> to vector<32x32xbf16>
    %18 = vector.extract_strided_slice %11 {offsets = [6, 0], sizes = [32, 32], strides = [1, 1]} : vector<39x32xbf16> to vector<32x32xbf16>
    %19 = vector.extract_strided_slice %11 {offsets = [7, 0], sizes = [32, 32], strides = [1, 1]} : vector<39x32xbf16> to vector<32x32xbf16>
    %20 = tpu.concatenate %12, %13, %14, %15, %16, %17, %18, %19 in 1 : vector<32x32xbf16>, vector<32x32xbf16>, vector<32x32xbf16>, vector<32x32xbf16>, vector<32x32xbf16>, vector<32x32xbf16>, vector<32x32xbf16>, vector<32x32xbf16> -> vector<32x256xbf16>
    %c0_4 = arith.constant 0 : index
    %c0_5 = arith.constant 0 : index
    %21 = vector.load %arg3[%c0_4, %c0_5] : memref<256x128xbf16, #tpu.memory_space<vmem>>, vector<256x128xbf16>
    %cst_6 = arith.constant dense<0.000000e+00> : vector<32x128xf32>
    %22 = tpu.matmul %20, %21, %cst_6 {dimension_numbers = #tpu.dot_dimension_numbers<[1], [0], [0], [1], [0, 0, 1, 1], [], []>} : vector<32x256xbf16>, vector<256x128xbf16>, vector<32x128xf32> -> vector<32x128xf32>
    %23 = vector.shape_cast %22 : vector<32x128xf32> to vector<2x16x128xf32>
    %c0_7 = arith.constant 0 : index
    %c0_8 = arith.constant 0 : index
    %24 = vector.load %arg4[%c0_7, %c0_8] : memref<16x128xf32, #tpu.memory_space<vmem>>, vector<16x128xf32>
    %25 = vector.shape_cast %24 : vector<16x128xf32> to vector<1x16x128xf32>
    %26 = vector.broadcast %25 : vector<1x16x128xf32> to vector<2x16x128xf32>
    %27 = arith.addf %23, %26 : vector<2x16x128xf32>
    %cst_9 = arith.constant 0.000000e+00 : f32
    %28 = vector.broadcast %cst_9 : f32 to vector<2x16x128xf32>
    %29 = arith.maximumf %27, %28 : vector<2x16x128xf32>
    %cst_10 = arith.constant dense<0xFF800000> : vector<2x128xf32>
    %30 = vector.multi_reduction <maximumf>, %29, %cst_10 [1] : vector<2x16x128xf32> to vector<2x128xf32>
    %c0_11 = arith.constant 0 : index
    %c0_12 = arith.constant 0 : index
    %31 = vector.load %arg5[%c0_11, %c0_12] : memref<128x128xf32, #tpu.memory_space<vmem>>, vector<128x128xf32>
    %cst_13 = arith.constant dense<0.000000e+00> : vector<2x128xf32>
    %32 = tpu.matmul %30, %31, %cst_13 {dimension_numbers = #tpu.dot_dimension_numbers<[1], [0], [0], [1], [0, 0, 1, 1], [], []>} : vector<2x128xf32>, vector<128x128xf32>, vector<2x128xf32> -> vector<2x128xf32>
    %c0_14 = arith.constant 0 : index
    %c0_15 = arith.constant 0 : index
    %33 = vector.load %arg6[%c0_14, %c0_15] : memref<1x128xf32, #tpu.memory_space<vmem>>, vector<1x128xf32>
    %34 = vector.broadcast %33 : vector<1x128xf32> to vector<2x128xf32>
    %35 = arith.addf %32, %34 : vector<2x128xf32>
    %c0_16 = arith.constant 0 : index
    %c0_17 = arith.constant 0 : index
    %36 = vector.load %arg7[%c0_16, %c0_17] : memref<2x128xf32, #tpu.memory_space<vmem>>, vector<2x128xf32>
    tpu.vector_store %arg7[%c0_16, %c0_17], %35 {strides = array<i32>} : memref<2x128xf32, #tpu.memory_space<vmem>>, vector<2x128xf32>,
    return
  }
  func.func @transform_0(%arg0: i32) -> (i32, i32) {
    %c0_i32 = arith.constant 0 : i32
    %c0_i32_0 = arith.constant 0 : i32
    return %arg0, %c0_i32 : i32, i32
  }
  func.func @transform_1(%arg0: i32) -> (i32, i32) {
    %c0_i32 = arith.constant 0 : i32
    %c0_i32_0 = arith.constant 0 : i32
    %c0_i32_1 = arith.constant 0 : i32
    return %c0_i32, %c0_i32_0 : i32, i32
  }
  func.func @transform_2(%arg0: i32) -> (i32, i32) {
    %c0_i32 = arith.constant 0 : i32
    %c0_i32_0 = arith.constant 0 : i32
    %c0_i32_1 = arith.constant 0 : i32
    return %c0_i32, %c0_i32_0 : i32, i32
  }
  func.func @transform_3(%arg0: i32) -> (i32, i32) {
    %c0_i32 = arith.constant 0 : i32
    %c0_i32_0 = arith.constant 0 : i32
    %c0_i32_1 = arith.constant 0 : i32
    return %c0_i32, %c0_i32_0 : i32, i32
  }
  func.func @transform_4(%arg0: i32) -> (i32, i32) {
    %c0_i32 = arith.constant 0 : i32
    %c0_i32_0 = arith.constant 0 : i32
    %c0_i32_1 = arith.constant 0 : i32
    return %c0_i32, %c0_i32_0 : i32, i32
  }
  func.func @transform_5(%arg0: i32) -> (i32, i32) {
    %c0_i32 = arith.constant 0 : i32
    %c0_i32_0 = arith.constant 0 : i32
    %c0_i32_1 = arith.constant 0 : i32
    return %c0_i32, %c0_i32_0 : i32, i32
  }
  func.func @transform_6(%arg0: i32) -> (i32, i32) {
    %c0_i32 = arith.constant 0 : i32
    %c0_i32_0 = arith.constant 0 : i32
    return %arg0, %c0_i32 : i32, i32
  }
}

</mosaic_0001>

<llo_original>
// kernel: wordcnn_forward.1
$region0: #{wordcnn_forward.1}
  #allocation0 [shape = 'u32[]', space=smem, size = 0x4, offset = 0x4, fixed_abs, tag = 'smem constant byte address 0x4 - core index']
  #allocation1 [shape = 'u32[144,128]{1,0:T(1,128)}', space=vmem, size = 0x12000, scoped, tag = 'internal scratch']
  %s0 = inlined_call_operand.vmem [shape: s32[32,1], index: 0, kind: input, shape index: {}]
  %s1 = inlined_call_operand.vmem [shape: bf16[128,32], index: 1, kind: input, shape index: {}]
  %s2 = inlined_call_operand.vmem [shape: bf16[256,128], index: 2, kind: input, shape index: {}]
  %s3 = inlined_call_operand.vmem [shape: f32[16,128], index: 3, kind: input, shape index: {}]
  %s4 = inlined_call_operand.vmem [shape: f32[128,128], index: 4, kind: input, shape index: {}]
  %s5 = inlined_call_operand.vmem [shape: f32[1,128], index: 5, kind: input, shape index: {}]
  %s6 = inlined_call_operand.hbm [shape: f32[2,128], index: 6, kind: output, shape index: {}]
  %s7 = sld [smem:[#allocation0]]
  $region34: #{wordcnn_forward.1} parent=0
    _
  %s9 = ssub.s32 1, %s7
  %s10 = scalar_select 0, %s9, %s7
  $region1: #{wordcnn_forward.1} parent=0
    #allocation2 [shape = 'u8[1024]{0}', space=vmem, size = 0x400, scoped, tag = 'output window, operand 0, single buffered']
    #allocation3 [shape = 's32[1]{0}', space=sflag, size = 0x4, scoped, tag = 'scoped memory for wordcnn_forward.1']
    %11 = vsyncpa [#allocation3], 0
    // Predicated region
    $region2: #{wordcnn_forward.1} parent=1 // pred_check
      _
    $region3: #{wordcnn_forward.1} parent=1 // pred_check_branch
      %13 = sbr.rel (0) target = $region5
    $region4: #{wordcnn_forward.1} parent=1 // pred_region
      _
    $region5: #{wordcnn_forward.1} parent=1 // pred_fallthru
      _
    // Predicated region
    $region6: #{wordcnn_forward.1} parent=1 // pred_check
      _
    $region7: #{wordcnn_forward.1} parent=1 // pred_check_branch
      %15 = sbr.rel (0) target = $region9
    $region8: #{wordcnn_forward.1} parent=1 // pred_region
      _
    $region9: #{wordcnn_forward.1} parent=1 // pred_fallthru
      _
    // Predicated region
    $region10: #{wordcnn_forward.1} parent=1 // pred_check
      _
    $region11: #{wordcnn_forward.1} parent=1 // pred_check_branch
      %17 = sbr.rel (0) target = $region13
    $region12: #{wordcnn_forward.1} parent=1 // pred_region
      _
    $region13: #{wordcnn_forward.1} parent=1 // pred_fallthru
      _
    // Predicated region
    $region14: #{wordcnn_forward.1} parent=1 // pred_check
      _
    $region15: #{wordcnn_forward.1} parent=1 // pred_check_branch
      %19 = sbr.rel (0) target = $region17
    $region16: #{wordcnn_forward.1} parent=1 // pred_region
      _
    $region17: #{wordcnn_forward.1} parent=1 // pred_fallthru
      _
    // Predicated region
    $region18: #{wordcnn_forward.1} parent=1 // pred_check
      _
    $region19: #{wordcnn_forward.1} parent=1 // pred_check_branch
      %21 = sbr.rel (0) target = $region21
    $region20: #{wordcnn_forward.1} parent=1 // pred_region
      _
    $region21: #{wordcnn_forward.1} parent=1 // pred_fallthru
      _
    // Predicated region
    $region22: #{wordcnn_forward.1} parent=1 // pred_check
      _
    $region23: #{wordcnn_forward.1} parent=1 // pred_check_branch
      %23 = sbr.rel (0) target = $region25
    $region24: #{wordcnn_forward.1} parent=1 // pred_region
      _
    $region25: #{wordcnn_forward.1} parent=1 // pred_fallthru
      _
    %v25 = vld [vmem:[%s0] sm:$0xff]
    %v26 = vld [vmem:[%s0 + $0x8] sm:$0xff]
    %v27 = vld [vmem:[%s0 + $0x10] sm:$0xff]
    %v28 = vld [vmem:[%s0 + $0x18] sm:$0xff]
    %v29 = vlaneseq
    %v30 = vand.u32 %v29, 127
    %31 = vset.pattern.permute.xlu0 0
    %32 = vperm.xlu0 %31, %v25
    %v33 = vpop.permute.xlu0 %32
    %34 = vset.pattern.permute.xlu0 0
    %35 = vperm.xlu0 %34, %v26
    %v36 = vpop.permute.xlu0 %35
    %37 = vset.pattern.permute.xlu0 0
    %38 = vperm.xlu0 %37, %v27
    %v39 = vpop.permute.xlu0 %38
    %40 = vset.pattern.permute.xlu0 0
    %41 = vperm.xlu0 %40, %v28
    %v42 = vpop.permute.xlu0 %41
    %vm43 = vcmp.eq.s32.totalorder %v30, %v33
    %vm44 = vcmp.eq.s32.totalorder %v30, %v36
    %vm45 = vcmp.eq.s32.totalorder %v30, %v39
    %vm46 = vcmp.eq.s32.totalorder %v30, %v42
    %v47 = vsel %vm43, 1, 0
    %v48 = vsel %vm44, 1, 0
    %v49 = vsel %vm45, 1, 0
    %v50 = vsel %vm46, 1, 0
    %v51 = vcvt.s32.f32 %v47
    %v52 = vcvt.s32.f32 %v48
    %v53 = vcvt.s32.f32 %v49
    %v54 = vcvt.s32.f32 %v50
    %v55 = vpack.c.bf16 %v52, %v51
    %v56 = vpack.c.bf16 %v54, %v53
    %v57 = vld [vmem:[%s1] sm:$0xf]
    %v58 = vld [vmem:[%s1 + $0x4] sm:$0xf]
    %v59 = vld [vmem:[%s1 + $0x8] sm:$0xf]
    %v60 = vld [vmem:[%s1 + $0xc] sm:$0xf]
    %v61 = vld [vmem:[%s1 + $0x10] sm:$0xf]
    %v62 = vld [vmem:[%s1 + $0x14] sm:$0xf]
    %v63 = vld [vmem:[%s1 + $0x18] sm:$0xf]
    %v64 = vld [vmem:[%s1 + $0x1c] sm:$0xf]
    %v65 = vld [vmem:[%s1 + $0x20] sm:$0xf]
    %v66 = vld [vmem:[%s1 + $0x24] sm:$0xf]
    %v67 = vld [vmem:[%s1 + $0x28] sm:$0xf]
    %v68 = vld [vmem:[%s1 + $0x2c] sm:$0xf]
    %v69 = vld [vmem:[%s1 + $0x30] sm:$0xf]
    %v70 = vld [vmem:[%s1 + $0x34] sm:$0xf]
    %v71 = vld [vmem:[%s1 + $0x38] sm:$0xf]
    %v72 = vld [vmem:[%s1 + $0x3c] sm:$0xf]
    %v89 = vunpack.c.l.b16 %v57
    %v90 = vunpack.c.l.b16 %v58
    %v91 = vunpack.c.l.b16 %v59
    %v92 = vunpack.c.l.b16 %v60
    %v93 = vunpack.c.l.b16 %v61
    %v94 = vunpack.c.l.b16 %v62
    %v95 = vunpack.c.l.b16 %v63
    %v96 = vunpack.c.l.b16 %v64
    %v97 = vunpack.c.l.b16 %v65
    %v98 = vunpack.c.l.b16 %v66
    %v99 = vunpack.c.l.b16 %v67
    %v100 = vunpack.c.l.b16 %v68
    %v101 = vunpack.c.l.b16 %v69
    %v102 = vunpack.c.l.b16 %v70
    %v103 = vunpack.c.l.b16 %v71
    %v104 = vunpack.c.l.b16 %v72
    %v105 = vpack.c.b16 %v90, %v89
    %v106 = vpack.c.b16 %v92, %v91
    %v107 = vpack.c.b16 %v94, %v93
    %v108 = vpack.c.b16 %v96, %v95
    %v109 = vpack.c.b16 %v98, %v97
    %v110 = vpack.c.b16 %v100, %v99
    %v111 = vpack.c.b16 %v102, %v101
    %v112 = vpack.c.b16 %v104, %v103
    %121 = vmatprep.subr.bf16.mxu0 0
    %122 = vmatpush1.bf16.msra.mxu0 %v105
    %123 = vmatprep.subr.bf16.mxu0 0
    %124 = vmatpush1.bf16.msra.mxu0 %v106
    %125 = vmatprep.subr.bf16.mxu0 0
    %126 = vmatpush1.bf16.msra.mxu0 %v107
    %127 = vmatprep.subr.bf16.mxu0 0
    %128 = vmatpush1.bf16.msra.mxu0 %v108
    %129 = vmatprep.subr.bf16.mxu0 0
    %130 = vmatpush1.bf16.msra.mxu0 %v109
    %131 = vmatprep.subr.bf16.mxu0 0
    %132 = vmatpush1.bf16.msra.mxu0 %v110
    %133 = vmatprep.subr.bf16.mxu0 0
    %134 = vmatpush1.bf16.msra.mxu0 %v111
    %135 = vmatprep.subr.bf16.mxu0 0
    %136 = vmatpush1.bf16.msra.mxu0 %v112
    %137 = vmatprep.subr.bf16.mxu0 0
    %138 = vmatpush1.bf16.msra.mxu0 0
    %139 = vmatprep.subr.bf16.mxu0 0
    %140 = vmatpush1.bf16.msra.mxu0 0
    %141 = vmatprep.subr.bf16.mxu0 0
    %142 = vmatpush1.bf16.msra.mxu0 0
    %143 = vmatprep.subr.bf16.mxu0 0
    %144 = vmatpush1.bf16.msra.mxu0 0
    %145 = vmatprep.subr.bf16.mxu0 0
    %146 = vmatpush1.bf16.msra.mxu0 0
    %147 = vmatprep.subr.bf16.mxu0 0
    %148 = vmatpush1.bf16.msra.mxu0 0
    %149 = vmatprep.subr.bf16.mxu0 0
    %150 = vmatpush1.bf16.msra.mxu0 0
    %151 = vmatprep.subr.bf16.mxu0 0
    %152 = vmatpush1.bf16.msra.mxu0 0
    %153 = vmatprep.mubr.bf16.mxu0 0
    %154 = vmatmul.mubr.bf16.gmra.mrb[0].mxu0 %v55
    %v155 = vpop.f32.mrb[0].mxu0
    %v156 = vadd.f32 0.0, %v155
    %v157 = vpop.f32.mrb[0].mxu0
    %v158 = vpop.f32.mrb[0].mxu0
    %v159 = vadd.f32 0.0, %v158
    %v160 = vpop.f32.mrb[0].mxu0
    %161 = vmatprep.mubr.bf16.mxu0 0
    %162 = vmatmul.mubr.bf16.gmra.mrb[0].mxu0 %v56
    %v163 = vpop.f32.mrb[0].mxu0
    %v164 = vadd.f32 0.0, %v163
    %v165 = vpop.f32.mrb[0].mxu0
    %v166 = vpop.f32.mrb[0].mxu0
    %v167 = vadd.f32 0.0, %v166
    %v168 = vpop.f32.mrb[0].mxu0
    %169 = vdwg.mxu0
    %v170 = vpack.c.bf16 %v159, %v156
    %v171 = vpack.c.bf16 %v167, %v164
    %vm172 = vsmask.f32 7424
    %v174 = vshrl.u32 %v170, 16
    %v176 = vshll.u32 %v170, 16
    %v178 = vrot.slane %v176, 1
    %v179 = vor.u32 %v174, %v178
    %v181 = vshll.u32 %v171, 16
    %v183 = vrot.slane %v181, 1
    %v184 = vsel %vm172, %v179, %v183
    %v185 = vshrl.u32 %v171, 16
    %v187 = vor.u32 %v185, %v183
    %v189 = vshll.u32 0, 16
    %v191 = vrot.slane %v189, 1
    %v192 = vsel %vm172, %v187, %v191
    %193 = vrot.lane.b32.xlu0 %v184, 32
    %v194 = vpop.permute.xlu0 %193
    %195 = vrot.lane.b32.xlu0 %v192, 32
    %v196 = vpop.permute.xlu0 %195
    %vm200 = vcmask 1046528
    %v201 = vrot.slane %v170, 1
    %v202 = vrot.slane %v171, 1
    %v203 = vsel %vm200, %v201, %v202
    %v204 = vrot.slane 0, 1
    %v205 = vsel %vm200, %v202, %v204
    %206 = vrot.lane.b32.xlu0 %v203, 64
    %v207 = vpop.permute.xlu0 %206
    %208 = vrot.lane.b32.xlu0 %v205, 64
    %v209 = vpop.permute.xlu0 %208
    %vm210 = vsmask.f32 6400
    %v211 = vrot.slane %v174, 1
    %v212 = vrot.slane %v176, 2
    %v213 = vor.u32 %v211, %v212
    %v214 = vrot.slane %v185, 1
    %v215 = vrot.slane %v181, 2
    %v216 = vor.u32 %v214, %v215
    %v217 = vsel %vm210, %v213, %v216
    %v218 = vshrl.u32 0, 16
    %v220 = vrot.slane %v218, 1
    %v221 = vrot.slane %v189, 2
    %v222 = vor.u32 %v220, %v221
    %v223 = vsel %vm210, %v216, %v222
    %224 = vrot.lane.b32.xlu0 %v217, 96
    %v225 = vpop.permute.xlu0 %224
    %226 = vrot.lane.b32.xlu0 %v223, 96
    %v227 = vpop.permute.xlu0 %226
    %vm228 = vcmask 1045504
    %v229 = vrot.slane %v170, 2
    %v230 = vrot.slane %v171, 2
    %v231 = vsel %vm228, %v229, %v230
    %v232 = vrot.slane 0, 2
    %v233 = vsel %vm228, %v230, %v232
    %vm234 = vsmask.f32 5376
    %v235 = vrot.slane %v174, 2
    %v236 = vrot.slane %v176, 3
    %v237 = vor.u32 %v235, %v236
    %v238 = vrot.slane %v185, 2
    %v239 = vrot.slane %v181, 3
    %v240 = vor.u32 %v238, %v239
    %v241 = vsel %vm234, %v237, %v240
    %v242 = vrot.slane %v218, 2
    %v243 = vrot.slane %v189, 3
    %v244 = vor.u32 %v242, %v243
    %v245 = vsel %vm234, %v240, %v244
    %246 = vrot.lane.b32.xlu0 %v241, 32
    %v247 = vpop.permute.xlu0 %246
    %248 = vrot.lane.b32.xlu0 %v245, 32
    %v249 = vpop.permute.xlu0 %248
    %vm250 = vcmask 1044480
    %v251 = vrot.slane %v170, 3
    %v252 = vrot.slane %v171, 3
    %v253 = vsel %vm250, %v251, %v252
    %v254 = vrot.slane 0, 3
    %v255 = vsel %vm250, %v252, %v254
    %256 = vrot.lane.b32.xlu0 %v253, 64
    %v257 = vpop.permute.xlu0 %256
    %258 = vrot.lane.b32.xlu0 %v255, 64
    %v259 = vpop.permute.xlu0 %258
    %vm260 = vsmask.f32 4352
    %v261 = vrot.slane %v174, 3
    %v262 = vrot.slane %v176, 4
    %v263 = vor.u32 %v261, %v262
    %v264 = vrot.slane %v185, 3
    %v265 = vrot.slane %v181, 4
    %v266 = vor.u32 %v264, %v265
    %v267 = vsel %vm260, %v263, %v266
    %v268 = vrot.slane %v218, 3
    %v269 = vrot.slane %v189, 4
    %v270 = vor.u32 %v268, %v269
    %v271 = vsel %vm260, %v266, %v270
    %272 = vrot.lane.b32.xlu0 %v267, 96
    %v273 = vpop.permute.xlu0 %272
    %274 = vrot.lane.b32.xlu0 %v271, 96
    %v275 = vpop.permute.xlu0 %274
    %vm276 = vcmask 261120
    %v278 = vsel %vm276, %v170, %v194
    %v280 = vsel %vm276, %v171, %v196
    %vm281 = vcmask 523264
    %v283 = vsel %vm281, %v278, %v207
    %v285 = vsel %vm281, %v280, %v209
    %vm286 = vcmask 785408
    %v288 = vsel %vm286, %v283, %v225
    %v291 = vsel %vm286, %v285, %v227
    %v295 = vsel %vm276, %v231, %v247
    %v298 = vsel %vm276, %v233, %v249
    %v300 = vsel %vm281, %v295, %v257
    %v302 = vsel %vm281, %v298, %v259
    %v304 = vsel %vm286, %v300, %v273
    %v307 = vsel %vm286, %v302, %v275
    %v309 = vld [vmem:[%s2] sm:$0xf]
    %v310 = vld [vmem:[%s2 + $0x4] sm:$0xf]
    %v311 = vld [vmem:[%s2 + $0x8] sm:$0xf]
    %v312 = vld [vmem:[%s2 + $0xc] sm:$0xf]
    %v313 = vld [vmem:[%s2 + $0x10] sm:$0xf]
    %v314 = vld [vmem:[%s2 + $0x14] sm:$0xf]
    %v315 = vld [vmem:[%s2 + $0x18] sm:$0xf]
    %v316 = vld [vmem:[%s2 + $0x1c] sm:$0xf]
    %v317 = vld [vmem:[%s2 + $0x20] sm:$0xf]
    %v318 = vld [vmem:[%s2 + $0x24] sm:$0xf]
    %v319 = vld [vmem:[%s2 + $0x28] sm:$0xf]
    %v320 = vld [vmem:[%s2 + $0x2c] sm:$0xf]
    %v321 = vld [vmem:[%s2 + $0x30] sm:$0xf]
    %v322 = vld [vmem:[%s2 + $0x34] sm:$0xf]
    %v323 = vld [vmem:[%s2 + $0x38] sm:$0xf]
    %v324 = vld [vmem:[%s2 + $0x3c] sm:$0xf]
    %v325 = vld [vmem:[%s2 + $0x40] sm:$0xf]
    %v326 = vld [vmem:[%s2 + $0x44] sm:$0xf]
    %v327 = vld [vmem:[%s2 + $0x48] sm:$0xf]
    %v328 = vld [vmem:[%s2 + $0x4c] sm:$0xf]
    %v329 = vld [vmem:[%s2 + $0x50] sm:$0xf]
    %v330 = vld [vmem:[%s2 + $0x54] sm:$0xf]
    %v331 = vld [vmem:[%s2 + $0x58] sm:$0xf]
    %v332 = vld [vmem:[%s2 + $0x5c] sm:$0xf]
    %v333 = vld [vmem:[%s2 + $0x60] sm:$0xf]
    %v334 = vld [vmem:[%s2 + $0x64] sm:$0xf]
    %v335 = vld [vmem:[%s2 + $0x68] sm:$0xf]
    %v336 = vld [vmem:[%s2 + $0x6c] sm:$0xf]
    %v337 = vld [vmem:[%s2 + $0x70] sm:$0xf]
    %v338 = vld [vmem:[%s2 + $0x74] sm:$0xf]
    %v339 = vld [vmem:[%s2 + $0x78] sm:$0xf]
    %v340 = vld [vmem:[%s2 + $0x7c] sm:$0xf]
    %v373 = vunpack.c.l.b16 %v309
    %v374 = vunpack.c.l.b16 %v310
    %v375 = vunpack.c.l.b16 %v311
    %v376 = vunpack.c.l.b16 %v312
    %v377 = vunpack.c.l.b16 %v313
    %v378 = vunpack.c.l.b16 %v314
    %v379 = vunpack.c.l.b16 %v315
    %v380 = vunpack.c.l.b16 %v316
    %v381 = vunpack.c.l.b16 %v317
    %v382 = vunpack.c.l.b16 %v318
    %v383 = vunpack.c.l.b16 %v319
    %v384 = vunpack.c.l.b16 %v320
    %v385 = vunpack.c.l.b16 %v321
    %v386 = vunpack.c.l.b16 %v322
    %v387 = vunpack.c.l.b16 %v323
    %v388 = vunpack.c.l.b16 %v324
    %v389 = vunpack.c.l.b16 %v325
    %v390 = vunpack.c.l.b16 %v326
    %v391 = vunpack.c.l.b16 %v327
    %v392 = vunpack.c.l.b16 %v328
    %v393 = vunpack.c.l.b16 %v329
    %v394 = vunpack.c.l.b16 %v330
    %v395 = vunpack.c.l.b16 %v331
    %v396 = vunpack.c.l.b16 %v332
    %v397 = vunpack.c.l.b16 %v333
    %v398 = vunpack.c.l.b16 %v334
    %v399 = vunpack.c.l.b16 %v335
    %v400 = vunpack.c.l.b16 %v336
    %v401 = vunpack.c.l.b16 %v337
    %v402 = vunpack.c.l.b16 %v338
    %v403 = vunpack.c.l.b16 %v339
    %v404 = vunpack.c.l.b16 %v340
    %v405 = vpack.c.b16 %v374, %v373
    %v406 = vpack.c.b16 %v376, %v375
    %v407 = vpack.c.b16 %v378, %v377
    %v408 = vpack.c.b16 %v380, %v379
    %v409 = vpack.c.b16 %v382, %v381
    %v410 = vpack.c.b16 %v384, %v383
    %v411 = vpack.c.b16 %v386, %v385
    %v412 = vpack.c.b16 %v388, %v387
    %v413 = vpack.c.b16 %v390, %v389
    %v414 = vpack.c.b16 %v392, %v391
    %v415 = vpack.c.b16 %v394, %v393
    %v416 = vpack.c.b16 %v396, %v395
    %v417 = vpack.c.b16 %v398, %v397
    %v418 = vpack.c.b16 %v400, %v399
    %v419 = vpack.c.b16 %v402, %v401
    %v420 = vpack.c.b16 %v404, %v403
    %437 = vmatprep.subr.bf16.mxu0 0
    %438 = vmatpush1.bf16.msra.mxu0 %v405
    %439 = vmatprep.subr.bf16.mxu0 0
    %440 = vmatpush1.bf16.msra.mxu0 %v406
    %441 = vmatprep.subr.bf16.mxu0 0
    %442 = vmatpush1.bf16.msra.mxu0 %v407
    %443 = vmatprep.subr.bf16.mxu0 0
    %444 = vmatpush1.bf16.msra.mxu0 %v408
    %445 = vmatprep.subr.bf16.mxu0 0
    %446 = vmatpush1.bf16.msra.mxu0 %v409
    %447 = vmatprep.subr.bf16.mxu0 0
    %448 = vmatpush1.bf16.msra.mxu0 %v410
    %449 = vmatprep.subr.bf16.mxu0 0
    %450 = vmatpush1.bf16.msra.mxu0 %v411
    %451 = vmatprep.subr.bf16.mxu0 0
    %452 = vmatpush1.bf16.msra.mxu0 %v412
    %453 = vmatprep.subr.bf16.mxu0 0
    %454 = vmatpush1.bf16.msra.mxu0 %v413
    %455 = vmatprep.subr.bf16.mxu0 0
    %456 = vmatpush1.bf16.msra.mxu0 %v414
    %457 = vmatprep.subr.bf16.mxu0 0
    %458 = vmatpush1.bf16.msra.mxu0 %v415
    %459 = vmatprep.subr.bf16.mxu0 0
    %460 = vmatpush1.bf16.msra.mxu0 %v416
    %461 = vmatprep.subr.bf16.mxu0 0
    %462 = vmatpush1.bf16.msra.mxu0 %v417
    %463 = vmatprep.subr.bf16.mxu0 0
    %464 = vmatpush1.bf16.msra.mxu0 %v418
    %465 = vmatprep.subr.bf16.mxu0 0
    %466 = vmatpush1.bf16.msra.mxu0 %v419
    %467 = vmatprep.subr.bf16.mxu0 0
    %468 = vmatpush1.bf16.msra.mxu0 %v420
    %469 = vmatprep.mubr.bf16.mxu0 %v304
    %470 = vmatmul.mubr.bf16.gmra.mrb[0].mxu0 %v288
    %v471 = vpop.f32.mrb[0].mxu0
    %v472 = vadd.f32 0.0, %v471
    %v473 = vpop.f32.mrb[0].mxu0
    %v474 = vpop.f32.mrb[0].mxu0
    %v475 = vadd.f32 0.0, %v474
    %v476 = vpop.f32.mrb[0].mxu0
    %477 = vmatprep.mubr.bf16.mxu0 %v307
    %478 = vmatmul.mubr.bf16.gmra.mrb[0].mxu0 %v291
    %v479 = vpop.f32.mrb[0].mxu0
    %v480 = vadd.f32 0.0, %v479
    %v481 = vpop.f32.mrb[0].mxu0
    %v482 = vpop.f32.mrb[0].mxu0
    %v483 = vadd.f32 0.0, %v482
    %v484 = vpop.f32.mrb[0].mxu0
    %485 = vdwg.mxu0
    %v486 = vld [vmem:[%s3] sm:$0xff]
    %v487 = vld [vmem:[%s3 + $0x8] sm:$0xff]
    %v488 = vadd.f32 %v472, %v486
    %v489 = vadd.f32 %v475, %v487
    %v490 = vadd.f32 %v480, %v486
    %v491 = vadd.f32 %v483, %v487
    %v492 = vmax.f32 %v488, 0.0
    %v493 = vmax.f32 %v489, 0.0
    %v494 = vmax.f32 %v490, 0.0
    %v495 = vmax.f32 %v491, 0.0
    %v496 = vmax.f32 %v492, %v493
    %v497 = vrot.slane %v496, 4
    %v498 = vmax.f32 %v496, %v497
    %v499 = vrot.slane %v498, 2
    %v500 = vmax.f32 %v498, %v499
    %v501 = vrot.slane %v500, 1
    %v502 = vmax.f32 %v500, %v501
    %v503 = vmax.f32 %v494, %v495
    %v504 = vrot.slane %v503, 4
    %v505 = vmax.f32 %v503, %v504
    %v506 = vrot.slane %v505, 2
    %v507 = vmax.f32 %v505, %v506
    %v508 = vrot.slane %v507, 1
    %v509 = vmax.f32 %v507, %v508
    %v510 = vld [vmem:[%s4] sm:$0xff]
    %v511 = vld [vmem:[%s4 + $0x8] sm:$0xff]
    %v512 = vld [vmem:[%s4 + $0x10] sm:$0xff]
    %v513 = vld [vmem:[%s4 + $0x18] sm:$0xff]
    %v514 = vld [vmem:[%s4 + $0x20] sm:$0xff]
    %v515 = vld [vmem:[%s4 + $0x28] sm:$0xff]
    %v516 = vld [vmem:[%s4 + $0x30] sm:$0xff]
    %v517 = vld [vmem:[%s4 + $0x38] sm:$0xff]
    %v518 = vld [vmem:[%s4 + $0x40] sm:$0xff]
    %v519 = vld [vmem:[%s4 + $0x48] sm:$0xff]
    %v520 = vld [vmem:[%s4 + $0x50] sm:$0xff]
    %v521 = vld [vmem:[%s4 + $0x58] sm:$0xff]
    %v522 = vld [vmem:[%s4 + $0x60] sm:$0xff]
    %v523 = vld [vmem:[%s4 + $0x68] sm:$0xff]
    %v524 = vld [vmem:[%s4 + $0x70] sm:$0xff]
    %v525 = vld [vmem:[%s4 + $0x78] sm:$0xff]
    %v526 = vld [vmem:[%s5] sm:$0x1]
    %v528 = vlaneseq
    %v529 = vshrl.u32 %v528, 7
    %v530 = vsub.s32 0, %v529
    %v531 = vrot.slane %v526, %v530
    %vm535 = vcmask 1041409
    %v536 = vsel %vm535, %v509, %v502
    %538 = vmatprep.subr.mxu0 0.0
    %539 = vmatpush1.msra.mxu0 %v510
    %540 = vmatprep.subr.mxu0 0.0
    %541 = vmatpush1.msra.mxu0 %v511
    %542 = vmatprep.subr.mxu0 0.0
    %543 = vmatpush1.msra.mxu0 %v512
    %544 = vmatprep.subr.mxu0 0.0
    %545 = vmatpush1.msra.mxu0 %v513
    %546 = vmatprep.subr.mxu0 0.0
    %547 = vmatpush1.msra.mxu0 %v514
    %548 = vmatprep.subr.mxu0 0.0
    %549 = vmatpush1.msra.mxu0 %v515
    %550 = vmatprep.subr.mxu0 0.0
    %551 = vmatpush1.msra.mxu0 %v516
    %552 = vmatprep.subr.mxu0 0.0
    %553 = vmatpush1.msra.mxu0 %v517
    %554 = vmatprep.subr.mxu0 0.0
    %555 = vmatpush1.msra.mxu0 %v518
    %556 = vmatprep.subr.mxu0 0.0
    %557 = vmatpush1.msra.mxu0 %v519
    %558 = vmatprep.subr.mxu0 0.0
    %559 = vmatpush1.msra.mxu0 %v520
    %560 = vmatprep.subr.mxu0 0.0
    %561 = vmatpush1.msra.mxu0 %v521
    %562 = vmatprep.subr.mxu0 0.0
    %563 = vmatpush1.msra.mxu0 %v522
    %564 = vmatprep.subr.mxu0 0.0
    %565 = vmatpush1.msra.mxu0 %v523
    %566 = vmatprep.subr.mxu0 0.0
    %567 = vmatpush1.msra.mxu0 %v524
    %568 = vmatprep.subr.mxu0 0.0
    %569 = vmatpush1.msra.mxu0 %v525
    %570 = vmatprep.subr.mxu0 0.0
    %571 = vmatpush1.msra.mxu0 0.0
    %572 = vmatprep.subr.mxu0 0.0
    %573 = vmatpush1.msra.mxu0 0.0
    %574 = vmatprep.subr.mxu0 0.0
    %575 = vmatpush1.msra.mxu0 0.0
    %576 = vmatprep.subr.mxu0 0.0
    %577 = vmatpush1.msra.mxu0 0.0
    %578 = vmatprep.subr.mxu0 0.0
    %579 = vmatpush1.msra.mxu0 0.0
    %580 = vmatprep.subr.mxu0 0.0
    %581 = vmatpush1.msra.mxu0 0.0
    %582 = vmatprep.subr.mxu0 0.0
    %583 = vmatpush1.msra.mxu0 0.0
    %584 = vmatprep.subr.mxu0 0.0
    %585 = vmatpush1.msra.mxu0 0.0
    %586 = vmatprep.subr.mxu0 0.0
    %587 = vmatpush1.msra.mxu0 0.0
    %588 = vmatprep.subr.mxu0 0.0
    %589 = vmatpush1.msra.mxu0 0.0
    %590 = vmatprep.subr.mxu0 0.0
    %591 = vmatpush1.msra.mxu0 0.0
    %592 = vmatprep.subr.mxu0 0.0
    %593 = vmatpush1.msra.mxu0 0.0
    %594 = vmatprep.subr.mxu0 0.0
    %595 = vmatpush1.msra.mxu0 0.0
    %596 = vmatprep.subr.mxu0 0.0
    %597 = vmatpush1.msra.mxu0 0.0
    %598 = vmatprep.subr.mxu0 0.0
    %599 = vmatpush1.msra.mxu0 0.0
    %600 = vmatprep.subr.mxu0 0.0
    %601 = vmatpush1.msra.mxu0 0.0
    %602 = vmatprep.mubr.f32.mxu0 0.0
    %603 = vmatmul.mubr.f32.gmra.mrb[0].mxu0 %v536
    %v604 = vpop.f32.mrb[0].mxu0
    %v605 = vadd.f32 %v531, %v604
    %v606 = vpop.f32.mrb[0].mxu0
    %607 = vdwg.mxu0
    %608 = vst [vmem:[#allocation2] sm:$0x3] %v605
    // Predicated region
    $region26: #{wordcnn_forward.1} parent=1 // pred_check
      _
    $region27: #{wordcnn_forward.1} parent=1 // pred_check_branch
      %610 = sbr.rel (0) target = $region29
    $region28: #{wordcnn_forward.1} parent=1 // pred_region
      %s612 = ssub.s32 32, 32
      %613 = vsyncadd [#allocation3], %s612
      %s615 = sshll.u32 [#allocation2], 4
      %s616 = int_to_ptr.vmem [resolvable:$true] %s615
      %618 = dma.vmem_to_hbm [thread:$0]  %s616, 32, %s6, [#allocation3]
    $region29: #{wordcnn_forward.1} parent=1 // pred_fallthru
      _
    // Predicated region
    $region30: #{wordcnn_forward.1} parent=1 // pred_check
      _
    $region31: #{wordcnn_forward.1} parent=1 // pred_check_branch
      %620 = sbr.rel (0) target = $region33
    $region32: #{wordcnn_forward.1} parent=1 // pred_region
      %621 = dma.done [#allocation3], 32
    $region33: #{wordcnn_forward.1} parent=1 // pred_fallthru
      _
    %622 = vsyncpa [#allocation3], 1

</llo_original>
